<compile_context>
chip_gen: v7x
topology: tpu7x:2x2x1
jax: 0.10.0
libtpu: 0.0.40
codegen_flags: <defaults>
</compile_context>

<pallas_src>
import math

import jax
import jax.numpy as jnp
from jax import lax
from jax.experimental import pallas as pl
from jax.experimental.pallas import tpu as pltpu


# ----------------------------------------------------------------------------
# Kernel
# ----------------------------------------------------------------------------
def _make_attention_kernel(bt: int, seq_len: int, dp: int, compute_dtype):
    """bt: batch elements per grid step, seq_len: L, dp: lane-padded out_dim."""

    def kernel(x_ref, wqkv_ref, bqkv_ref, o_ref, qkv_ref):
        # ---- fused QKV projection: one MXU push with lane-dense N = 3*dp ----
        x = x_ref[...]                                     # (bt*L, Din) f32
        w = wqkv_ref[...]                                  # (Din, 3*dp) f32
        if compute_dtype != jnp.float32:
            x = x.astype(compute_dtype)
            w = w.astype(compute_dtype)
        qkv_ref[...] = (jnp.dot(x, w, preferred_element_type=jnp.float32)
                        + bqkv_ref[...])                   # f32 scratch

        # ---- per-batch attention epilogue (bounds live (L, L) score blocks) --
        def epilogue(b):
            r = b * seq_len
            if not isinstance(b, int) and seq_len % 8 == 0:
                r = pl.multiple_of(r, 8)                   # sublane-aligned hint
            q = qkv_ref[pl.ds(r, seq_len), pl.ds(0, dp)]          # scale folded in
            k = qkv_ref[pl.ds(r, seq_len), pl.ds(dp, dp)]
            v = qkv_ref[pl.ds(r, seq_len), pl.ds(2 * dp, dp)]

            if compute_dtype != jnp.float32:
                q_mm, k_mm = q.astype(compute_dtype), k.astype(compute_dtype)
            else:
                q_mm, k_mm = q, k
            # scores[l, m] = sum_d q[l, d] * k[m, d]  (contraction on the last
            # dim of both operands — no explicit K transpose / XLU vxpose).
            scores = lax.dot_general(q_mm, k_mm, (((1,), (1,)), ((), ())),
                                     preferred_element_type=jnp.float32)

            # Numerically stable row softmax in f32 (VPU/EUP f32 on all chips).
            m = jnp.max(scores, axis=-1, keepdims=True)
            e = jnp.exp(scores - m)
            denom = jnp.sum(e, axis=-1, keepdims=True)
            atten = e * pl.reciprocal(denom, approx=True)  # EUP vrcp, off VALU path

            if compute_dtype != jnp.float32:
                a_mm, v_mm = atten.astype(compute_dtype), v.astype(compute_dtype)
            else:
                a_mm, v_mm = atten, v
            out = jnp.dot(a_mm, v_mm, preferred_element_type=jnp.float32) + v
            o_ref[b] = out.astype(o_ref.dtype)

        if bt <= 4:
            for b in range(bt):          # tiny trip count: static unroll
                epilogue(b)
        else:
            pl.loop(0, bt)(epilogue)     # bounded live ranges for large Bt

        # TODO(synk): for very long L the per-batch (L, L) score block should be
        # replaced by an online-softmax (flash-style) K-tile loop to stay within
        # VMEM (mandatory earliest on v7x's 64 MiB).

    return kernel


# ----------------------------------------------------------------------------
# One-time parameter prep (hoisted out of the per-call wrapper)
# ----------------------------------------------------------------------------
def prepare_attention_params(params):
    """Fuse Wq/Wk/Wv into a lane-dense Wqkv and fold 1/sqrt(out_dim) into the
    Q columns.  Call once; reuse the result across forward calls."""
    in_dim, out_dim = params["wq"].shape
    dp = pl.cdiv(out_dim, 128) * 128               # lane-dense feature width
    scale = 1.0 / math.sqrt(float(out_dim))        # matches 1/torch.sqrt(out_dim)

    def pad_w(w):
        return jnp.pad(w.astype(jnp.float32), ((0, 0), (0, dp - out_dim)))

    def pad_b(b):
        return jnp.pad(b.astype(jnp.float32), ((0, dp - out_dim),))

    # Zero padding is inert: padded Q/K columns contribute 0 to the scores and
    # padded V columns stay 0 through atten@V + V (sliced away in the wrapper).
    wqkv = jnp.concatenate(
        [pad_w(params["wq"]) * scale, pad_w(params["wk"]), pad_w(params["wv"])],
        axis=1)
    bqkv = jnp.concatenate(
        [pad_b(params["bq"]) * scale, pad_b(params["bk"]), pad_b(params["bv"])]
    ).reshape(1, 3 * dp)
    return {"wqkv": wqkv, "bqkv": bqkv,
            "in_dim": in_dim, "out_dim": out_dim, "padded_dim": dp}


# ----------------------------------------------------------------------------
# Tiling / VMEM sizing helpers
# ----------------------------------------------------------------------------
def _vmem_budget_bytes():
    """~60% of the device's VMEM (v7x: ~38 MiB, v5e/v6e: ~77 MiB)."""
    try:
        cap = int(pltpu.get_tpu_info().vmem_capacity_bytes)
    except Exception:
        cap = 64 * 1024 * 1024      # conservative (v7x-sized) fallback
    return max(16 * 1024 * 1024, int(cap * 0.6))


def _choose_batch_tile(B, L, din, dp, rows_per_step, vmem_budget):
    sub = 8 // math.gcd(L, 8)                     # keep Bt*L a multiple of 8
    bt = max(1, min(B, rows_per_step // max(L, 1)))
    bt = pl.cdiv(bt, sub) * sub
    # >= 2 grid steps when the batch allows it (megacore / v7x's 2 TensorCores)
    if B > sub:
        half = (pl.cdiv(B, 2) // sub) * sub
        if half >= sub:
            bt = min(bt, half)

    def step_bytes(bt_):
        x_blk = 2 * bt_ * L * din * 4             # double-buffered input block
        o_blk = 2 * bt_ * L * dp * 4              # double-buffered output block
        w_blk = (din + 1) * 3 * dp * 4            # single-buffered weights + bias
        qkv = bt_ * L * 3 * dp * 4                # f32 scratch
        epi = 3 * L * L * 4 + 4 * L * dp * 4      # per-batch softmax temporaries
        return x_blk + o_blk + w_blk + qkv + epi

    while bt > sub and step_bytes(bt) > vmem_budget:
        bt -= sub
    return max(bt, 1)


def _constant_block_spec(shape):
    """Grid-invariant operand: fetch once, single-buffered when supported."""
    index_map = lambda *args: (0,) * len(shape)
    if hasattr(pl, "Buffered"):
        try:
            return pl.BlockSpec(shape, index_map, pipeline_mode=pl.Buffered(1))
        except TypeError:
            pass
    return pl.BlockSpec(shape, index_map)


# ----------------------------------------------------------------------------
# Forward wrapper
# ----------------------------------------------------------------------------
def attention_model_forward(plms1, seqlengths, prepared, *,
                            rows_per_step=512, compute_dtype=jnp.float32,
                            src_length_masking=False):
    """Pallas-TPU forward of AttentionModel.

    plms1:      [B, L, in_dim] float32
    seqlengths: [B] — inert: the module runs masked_softmax with
                src_length_masking=False, so lengths never change the output.
    prepared:   output of prepare_attention_params(params).
    """
    if src_length_masking:
        raise NotImplementedError(
            "AttentionModel uses src_length_masking=False; length masking is "
            "intentionally not implemented in this kernel.")
    del seqlengths

    B, L, din = plms1.shape
    assert din == prepared["in_dim"], "input feature dim mismatch"
    dout = prepared["out_dim"]
    dp = prepared["padded_dim"]

    vmem_budget = _vmem_budget_bytes()
    bt = _choose_batch_tile(B, L, din, dp, rows_per_step, vmem_budget)
    b_pad = pl.cdiv(B, bt) * bt

    x = plms1.astype(jnp.float32)
    if b_pad != B:
        # Padded batch rows pick up the biases and run through softmax; the
        # values are finite, wasted work only, and are sliced away below.
        x = jnp.pad(x, ((0, b_pad - B), (0, 0), (0, 0)))
    x_rows = x.reshape(b_pad * L, din)

    kernel = _make_attention_kernel(bt, L, dp, compute_dtype)
    out = pl.pallas_call(
        kernel,
        out_shape=jax.ShapeDtypeStruct((b_pad, L, dp), jnp.float32),
        grid_spec=pltpu.PrefetchScalarGridSpec(
            num_scalar_prefetch=0,
            grid=(b_pad // bt,),
            in_specs=[
                pl.BlockSpec((bt * L, din), lambda i: (i, 0)),   # activations
                _constant_block_spec((din, 3 * dp)),             # fused Wqkv
                _constant_block_spec((1, 3 * dp)),               # fused bias
            ],
            out_specs=pl.BlockSpec((bt, L, dp), lambda i: (i, 0, 0)),
            scratch_shapes=[pltpu.VMEM((bt * L, 3 * dp), jnp.float32)],
        ),
        compiler_params=pltpu.CompilerParams(
            dimension_semantics=("parallel",),
            vmem_limit_bytes=vmem_budget,
        ),
    )(x_rows, prepared["wqkv"], prepared["bqkv"])

    # Only pay for slicing when there is actually padding to drop.
    if b_pad != B:
        out = out[:B]
    if dp != dout:
        out = out[..., :dout]
    return out


# ----------------------------------------------------------------------------
# Pure-JAX reference + deterministic init (for self-checking)
# ----------------------------------------------------------------------------
def attention_model_reference(plms1, params):
    dout = params["wq"].shape[1]
    scale = 1.0 / math.sqrt(float(dout))
    q = plms1 @ params["wq"] + params["bq"]
    k = plms1 @ params["wk"] + params["bk"]
    v = plms1 @ params["wv"] + params["bv"]
    scores = jnp.einsum("bld,bmd->blm", q, k) * scale
    atten = jax.nn.softmax(scores.astype(jnp.float32), axis=-1)
    return jnp.einsum("blm,bmd->bld", atten, v) + v


def init_params(key, in_dim, out_dim):
    """Mimics nn.Linear's uniform(-1/sqrt(in), 1/sqrt(in)) init."""
    bound = 1.0 / math.sqrt(in_dim)
    keys = jax.random.split(key, 6)
    return {
        "wq": jax.random.uniform(keys[0], (in_dim, out_dim), jnp.float32, -bound, bound),
        "wk": jax.random.uniform(keys[1], (in_dim, out_dim), jnp.float32, -bound, bound),
        "wv": jax.random.uniform(keys[2], (in_dim, out_dim), jnp.float32, -bound, bound),
        "bq": jax.random.uniform(keys[3], (out_dim,), jnp.float32, -bound, bound),
        "bk": jax.random.uniform(keys[4], (out_dim,), jnp.float32, -bound, bound),
        "bv": jax.random.uniform(keys[5], (out_dim,), jnp.float32, -bound, bound),
    }


if __name__ == "__main__":
    # Primary shapes (module-consistent small demo): B=2, L=8, in=32, out=32.
    B, L, IN_DIM, OUT_DIM = 2, 8, 32, 32
    key = jax.random.PRNGKey(0)
    k_x, k_p = jax.random.split(key)

    plms1 = jax.random.normal(k_x, (B, L, IN_DIM), dtype=jnp.float32)
    seqlengths = jnp.full((B,), L, dtype=jnp.int32)       # inert (masking disabled)
    params = init_params(k_p, IN_DIM, OUT_DIM)
    prepared = prepare_attention_params(params)           # one-time weight prep

    ref = attention_model_reference(plms1, params)

    # f32 MXU-operand path (default).  Tolerance covers default TPU matmul
    # precision plus the approximate EUP reciprocal in the softmax.
    out = attention_model_forward(plms1, seqlengths, prepared)
    out = jax.block_until_ready(out)
    assert out.shape == (B, L, OUT_DIM)
    assert jnp.allclose(out, ref, atol=5e-3, rtol=5e-3), "f32 path mismatch"

    # bf16 MXU-operand path (f32 accumulate / f32 softmax) — v6e/v7x throughput.
    out_bf16 = attention_model_forward(plms1, seqlengths, prepared,
                                       compute_dtype=jnp.bfloat16)
    out_bf16 = jax.block_until_ready(out_bf16)
    assert jnp.allclose(out_bf16, ref, atol=5e-2, rtol=5e-2), "bf16 path mismatch"

    # Secondary shapes: lane padding (out_dim=20), batch padding (B=5 -> 6),
    # multiple batch elements per grid step (Bt=3), 2 grid steps.
    B2, L2, IN2, OUT2 = 5, 16, 48, 20
    k_x2, k_p2 = jax.random.split(jax.random.PRNGKey(1))
    plms2 = jax.random.normal(k_x2, (B2, L2, IN2), dtype=jnp.float32)
    params2 = init_params(k_p2, IN2, OUT2)
    prepared2 = prepare_attention_params(params2)
    out2 = attention_model_forward(plms2, jnp.full((B2,), L2, jnp.int32), prepared2)
    out2 = jax.block_until_ready(out2)
    ref2 = attention_model_reference(plms2, params2)
    assert out2.shape == (B2, L2, OUT2)
    assert jnp.allclose(out2, ref2, atol=5e-3, rtol=5e-3), "shape-2 mismatch"

    print("KERNEL_OK")
</pallas_src>

<mosaic_0001>
module attributes {stable_mosaic.version = 11 : i64} {
  func.func @kernel(%arg0: i32, %arg1: memref<8x32xf32, #tpu.memory_space<vmem>>, %arg2: memref<32x384xf32, #tpu.memory_space<vmem>>, %arg3: memref<1x384xf32, #tpu.memory_space<vmem>>, %arg4: memref<1x8x128xf32, #tpu.memory_space<vmem>>, %arg5: memref<8x384xf32, #tpu.memory_space<vmem>>) attributes {dimension_semantics = [#tpu.dimension_semantics<parallel>], iteration_bounds = array<i64: 2>, scalar_prefetch = 0 : i64, scratch_operands = 1 : i64, tpu.core_type = #tpu.core_type<tc>, window_params = [{transform_indices = @transform_0, window_bounds = array<i64: 8, 32>}, {pipeline_mode = #tpu.pipeline_mode<synchronous>, transform_indices = @transform_1, window_bounds = array<i64: 32, 384>}, {pipeline_mode = #tpu.pipeline_mode<synchronous>, transform_indices = @transform_2, window_bounds = array<i64: 1, 384>}, {transform_indices = @transform_3, window_bounds = array<i64: 1, 8, 128>}]} {
    %c0 = arith.constant 0 : index
    %c0_0 = arith.constant 0 : index
    %0 = vector.load %arg1[%c0, %c0_0] : memref<8x32xf32, #tpu.memory_space<vmem>>, vector<8x32xf32>
    %c0_1 = arith.constant 0 : index
    %c0_2 = arith.constant 0 : index
    %1 = vector.load %arg2[%c0_1, %c0_2] : memref<32x384xf32, #tpu.memory_space<vmem>>, vector<32x384xf32>
    %cst = arith.constant dense<0.000000e+00> : vector<8x384xf32>
    %2 = tpu.matmul %0, %1, %cst {dimension_numbers = #tpu.dot_dimension_numbers<[1], [0], [0], [1], [0, 0, 1, 1], [], []>} : vector<8x32xf32>, vector<32x384xf32>, vector<8x384xf32> -> vector<8x384xf32>
    %c0_3 = arith.constant 0 : index
    %c0_4 = arith.constant 0 : index
    %3 = vector.load %arg3[%c0_3, %c0_4] : memref<1x384xf32, #tpu.memory_space<vmem>>, vector<1x384xf32>
    %4 = vector.broadcast %3 : vector<1x384xf32> to vector<8x384xf32>
    %5 = arith.addf %2, %4 : vector<8x384xf32>
    %c0_5 = arith.constant 0 : index
    %c0_6 = arith.constant 0 : index
    %6 = vector.load %arg5[%c0_5, %c0_6] : memref<8x384xf32, #tpu.memory_space<vmem>>, vector<8x384xf32>
    tpu.vector_store %arg5[%c0_5, %c0_6], %5 {strides = array<i32>} : memref<8x384xf32, #tpu.memory_space<vmem>>, vector<8x384xf32>,
    %c0_7 = arith.constant 0 : index
    %c0_8 = arith.constant 0 : index
    %7 = vector.load %arg5[%c0_7, %c0_8] : memref<8x384xf32, #tpu.memory_space<vmem>>, vector<8x128xf32>
    %c0_9 = arith.constant 0 : index
    %c128 = arith.constant 128 : index
    %8 = vector.load %arg5[%c0_9, %c128] : memref<8x384xf32, #tpu.memory_space<vmem>>, vector<8x128xf32>
    %c0_10 = arith.constant 0 : index
    %c256 = arith.constant 256 : index
    %9 = vector.load %arg5[%c0_10, %c256] : memref<8x384xf32, #tpu.memory_space<vmem>>, vector<8x128xf32>
    %cst_11 = arith.constant dense<0.000000e+00> : vector<8x8xf32>
    %10 = tpu.matmul %7, %8, %cst_11 {dimension_numbers = #tpu.dot_dimension_numbers<[1], [1], [0], [0], [0, 0, 1, 0], [], []>} : vector<8x128xf32>, vector<8x128xf32>, vector<8x8xf32> -> vector<8x8xf32>
    %cst_12 = arith.constant dense<0xFF800000> : vector<8xf32>
    %11 = vector.multi_reduction <maximumf>, %10, %cst_12 [1] : vector<8x8xf32> to vector<8xf32>
    %12 = vector.shape_cast %11 : vector<8xf32> to vector<8x1xf32>
    %13 = vector.broadcast %12 : vector<8x1xf32> to vector<8x8xf32>
    %14 = arith.subf %10, %13 : vector<8x8xf32>
    %15 = math.exp %14 : vector<8x8xf32>
    %cst_13 = arith.constant dense<0.000000e+00> : vector<8xf32>
    %16 = vector.multi_reduction <add>, %15, %cst_13 [1] : vector<8x8xf32> to vector<8xf32>
    %17 = vector.shape_cast %16 : vector<8xf32> to vector<8x1xf32>
    %18 = tpu.reciprocal %17 {approx = true} : vector<8x1xf32> -> vector<8x1xf32>
    %19 = vector.broadcast %18 : vector<8x1xf32> to vector<8x8xf32>
    %20 = arith.mulf %15, %19 : vector<8x8xf32>
    %cst_14 = arith.constant dense<0.000000e+00> : vector<8x128xf32>
    %21 = tpu.matmul %20, %9, %cst_14 {dimension_numbers = #tpu.dot_dimension_numbers<[1], [0], [0], [1], [0, 0, 1, 1], [], []>} : vector<8x8xf32>, vector<8x128xf32>, vector<8x128xf32> -> vector<8x128xf32>
    %22 = arith.addf %21, %9 : vector<8x128xf32>
    %c0_15 = arith.constant 0 : index
    %c0_16 = arith.constant 0 : index
    %c0_17 = arith.constant 0 : index
    %23 = vector.load %arg4[%c0_15, %c0_16, %c0_17] : memref<1x8x128xf32, #tpu.memory_space<vmem>>, vector<1x8x128xf32>
    %24 = vector.shape_cast %23 : vector<1x8x128xf32> to vector<8x128xf32>
    %25 = vector.shape_cast %22 : vector<8x128xf32> to vector<1x8x128xf32>
    tpu.vector_store %arg4[%c0_15, %c0_16, %c0_17], %25 {strides = array<i32>} : memref<1x8x128xf32, #tpu.memory_space<vmem>>, vector<1x8x128xf32>,
    return
  }
  func.func @transform_0(%arg0: i32) -> (i32, i32) {
    %c0_i32 = arith.constant 0 : i32
    %c0_i32_0 = arith.constant 0 : i32
    return %arg0, %c0_i32 : i32, i32
  }
  func.func @transform_1(%arg0: i32) -> (i32, i32) {
    %c0_i32 = arith.constant 0 : i32
    %c0_i32_0 = arith.constant 0 : i32
    %c0_i32_1 = arith.constant 0 : i32
    return %c0_i32, %c0_i32_0 : i32, i32
  }
  func.func @transform_2(%arg0: i32) -> (i32, i32) {
    %c0_i32 = arith.constant 0 : i32
    %c0_i32_0 = arith.constant 0 : i32
    %c0_i32_1 = arith.constant 0 : i32
    return %c0_i32, %c0_i32_0 : i32, i32
  }
  func.func @transform_3(%arg0: i32) -> (i32, i32, i32) {
    %c0_i32 = arith.constant 0 : i32
    %c0_i32_0 = arith.constant 0 : i32
    %c0_i32_1 = arith.constant 0 : i32
    return %arg0, %c0_i32, %c0_i32_0 : i32, i32, i32
  }
}

</mosaic_0001>

<llo_original>
// kernel: tpu_custom_call.1
$region0: #{tpu_custom_call.1}
  #allocation0 [shape = 'u32[]', space=smem, size = 0x4, offset = 0x4, fixed_abs, tag = 'smem constant byte address 0x4 - core index']
  #allocation1 [shape = 'u32[144,128]{1,0:T(1,128)}', space=vmem, size = 0x12000, scoped, tag = 'internal scratch']
  #allocation2 [shape = 'f32[8,384]{1,0:T(8,128)}', space=vmem, size = 0x3000, scoped, tag = 'scratch operand']
  %s0 = inlined_call_operand.hbm [shape: f32[16,32], index: 0, kind: input, shape index: {}]
  %s1 = inlined_call_operand.hbm [shape: f32[32,384], index: 1, kind: input, shape index: {}]
  %s2 = inlined_call_operand.vmem [shape: f32[1,384], index: 2, kind: input, shape index: {}]
  %s3 = inlined_call_operand.hbm [shape: f32[2,8,128], index: 3, kind: output, shape index: {}]
  %s4 = sld [smem:[#allocation0]]
  $region53: #{tpu_custom_call.1} parent=0
    _
  %s6 = ssub.s32 1, %s4
  %s7 = scalar_select 0, %s6, %s4
  $region1: #{tpu_custom_call.1} parent=0
    #allocation3 [shape = 'u8[8192]{0}', space=vmem, size = 0x2000, scoped, tag = 'input window, operand 0']
    #allocation4 [shape = 's32[2]{0}', space=sflag, size = 0x8, scoped, tag = 'scoped memory for tpu_custom_call.1']
    #allocation5 [shape = 's32[2]{0}', space=sflag, size = 0x8, scoped, tag = 'scoped memory for tpu_custom_call.1']
    #allocation6 [shape = 'u8[49152]{0}', space=vmem, size = 0xc000, scoped, tag = 'input window, operand 1, single buffered']
    #allocation7 [shape = 's32[1]{0}', space=sflag, size = 0x4, scoped, tag = 'scoped memory for tpu_custom_call.1']
    #allocation8 [shape = 'u8[8192]{0}', space=vmem, size = 0x2000, scoped, tag = 'output window, operand 0']
    %8 = vsyncpa [#allocation4], 0
    %s9 = scalar_lea.sflag [#allocation4], 1
    %10 = vsyncpa %s9, 0
    %11 = vsyncpa [#allocation7], 0
    %12 = vsyncpa [#allocation5], 0
    %s13 = scalar_lea.sflag [#allocation5], 1
    %14 = vsyncpa %s13, 0
    loop: start=0, step=1, limit=4
    $region2: #{tpu_custom_call.1} parent=1 // loop_pre_header
      _
    $region3: #{tpu_custom_call.1} parent=1 // loop_header
      %s16 = sphi 0, %s20
      %p17 = scmp.ge.s32.totalorder %s16, 4
      %s26 = sphi 0, %s28
      %s29 = sphi 0, %s26
      %s30 = sphi 0, %s29
      %s46 = sphi 0, %s30
      %s50 = sphi 0, %s50
      %s52 = sphi 0, %s50
      %s53 = sphi 0, %s52
      %s67 = sphi 0, %s53
      %s71 = sphi 0, %s71
      %s73 = sphi 0, %s71
      %s74 = sphi 0, %s73
      %s88 = sphi 0, %s74
      %s94 = sphi 0, %s96
      %s97 = sphi 0, %s94
      %s98 = sphi 0, %s97
      %s114 = sphi 0, %s98
    $region4: #{tpu_custom_call.1} parent=1 // loop_header_branch
      %19 = sbr.rel (%p17) target = $region8
    $region5: #{tpu_custom_call.1} parent=1 // loop_body
      %s21 = ssub.s32 %s16, 1
      %s22 = ssub.s32 %s16, 2
      %s23 = sadd.s32 %s16, 1
      %s24 = ssub.s32 %s16, %s23
      %p25 = scmp.eq.s32.totalorder %s24, 0
      %s27 = sadd.s32 %s26, 1
      %s28 = scalar_select %p25, %s26, %s27
      %p31 = pneg %p25
      %p32 = scmp.eq.s32.totalorder %s16, 1
      %p33 = por %p31, %p32
      %p34 = scmp.ne.s32.totalorder %s26, %s29
      %p35 = scmp.eq.s32.totalorder %s16, 0
      %p36 = por %p34, %p35
      %p37 = scmp.ne.s32.totalorder %s26, %s29
      %p38 = scmp.eq.s32.totalorder %s21, 1
      %p39 = por %p37, %p38
      %p40 = scmp.ne.s32.totalorder %s29, %s30
      %p41 = scmp.eq.s32.totalorder %s21, 0
      %p42 = por %p40, %p41
      %p43 = scmp.ne.s32.totalorder %s29, %s30
      %p44 = scmp.eq.s32.totalorder %s22, 1
      %p45 = por %p43, %p44
      %p47 = scmp.ne.s32.totalorder %s30, %s46
      %p48 = scmp.eq.s32.totalorder %s22, 0
      %p49 = por %p47, %p48
      %s51 = sadd.s32 %s50, 1
      %p54 = scmp.eq.s32.totalorder %s16, 1
      %p55 = scmp.ne.s32.totalorder %s50, %s52
      %p56 = scmp.eq.s32.totalorder %s16, 0
      %p57 = por %p55, %p56
      %p58 = scmp.ne.s32.totalorder %s50, %s52
      %p59 = scmp.eq.s32.totalorder %s21, 1
      %p60 = por %p58, %p59
      %p61 = scmp.ne.s32.totalorder %s52, %s53
      %p62 = scmp.eq.s32.totalorder %s21, 0
      %p63 = por %p61, %p62
      %p64 = scmp.ne.s32.totalorder %s52, %s53
      %p65 = scmp.eq.s32.totalorder %s22, 1
      %p66 = por %p64, %p65
      %p68 = scmp.ne.s32.totalorder %s53, %s67
      %p69 = scmp.eq.s32.totalorder %s22, 0
      %p70 = por %p68, %p69
      %s72 = sadd.s32 %s71, 1
      %p75 = scmp.eq.s32.totalorder %s16, 1
      %p76 = scmp.ne.s32.totalorder %s71, %s73
      %p77 = scmp.eq.s32.totalorder %s16, 0
      %p78 = por %p76, %p77
      %p79 = scmp.ne.s32.totalorder %s71, %s73
      %p80 = scmp.eq.s32.totalorder %s21, 1
      %p81 = por %p79, %p80
      %p82 = scmp.ne.s32.totalorder %s73, %s74
      %p83 = scmp.eq.s32.totalorder %s21, 0
      %p84 = por %p82, %p83
      %p85 = scmp.ne.s32.totalorder %s73, %s74
      %p86 = scmp.eq.s32.totalorder %s22, 1
      %p87 = por %p85, %p86
      %p89 = scmp.ne.s32.totalorder %s74, %s88
      %p90 = scmp.eq.s32.totalorder %s22, 0
      %p91 = por %p89, %p90
      %s92 = ssub.s32 %s16, %s23
      %p93 = scmp.eq.s32.totalorder %s92, 0
      %s95 = sadd.s32 %s94, 1
      %s96 = scalar_select %p93, %s94, %s95
      %p99 = pneg %p93
      %p100 = scmp.eq.s32.totalorder %s16, 1
      %p101 = por %p99, %p100
      %p102 = scmp.ne.s32.totalorder %s94, %s97
      %p103 = scmp.eq.s32.totalorder %s16, 0
      %p104 = por %p102, %p103
      %p105 = scmp.ne.s32.totalorder %s94, %s97
      %p106 = scmp.eq.s32.totalorder %s21, 1
      %p107 = por %p105, %p106
      %p108 = scmp.ne.s32.totalorder %s97, %s98
      %p109 = scmp.eq.s32.totalorder %s21, 0
      %p110 = por %p108, %p109
      %p111 = scmp.ne.s32.totalorder %s97, %s98
      %p112 = scmp.eq.s32.totalorder %s22, 1
      %p113 = por %p111, %p112
      %p115 = scmp.ne.s32.totalorder %s98, %s114
      %p116 = scmp.eq.s32.totalorder %s22, 0
      %p117 = por %p115, %p116
      %p118 = scmp.le.s32.totalorder 1, %s16
      %p119 = scmp.lt.s32.totalorder %s16, 3
      %p120 = pnand %p118, %p119
      %p121 = pneg %p120
      // Predicated region
      $region9: #{tpu_custom_call.1} parent=5 // pred_check
        _
      $region10: #{tpu_custom_call.1} parent=5 // pred_check_branch
        %123 = sbr.rel (%p120) target = $region12
      $region11: #{tpu_custom_call.1} parent=5 // pred_region
        %s124 = ssub.s32 %s16, 1
        // Predicated region
        $region13: #{tpu_custom_call.1} parent=11 // pred_check
          %p125 = pneg %p63
        $region14: #{tpu_custom_call.1} parent=11 // pred_check_branch
          %127 = sbr.rel (%p125) target = $region16
        $region15: #{tpu_custom_call.1} parent=11 // pred_region
          %s129 = ssub.s32 1536, 1536
          %130 = vsyncadd [#allocation7], %s129
          %s131 = sshll.u32 [#allocation6], 4
          %s132 = int_to_ptr.vmem [resolvable:$true] %s131
          %137 = dma.hbm_to_vmem [thread:$0]  %s1, 1536, %s132, [#allocation7], 384, 384, 24
        $region16: #{tpu_custom_call.1} parent=11 // pred_fallthru
          _
        // Predicated region
        $region17: #{tpu_custom_call.1} parent=11 // pred_check
          %p138 = pneg %p84
        $region18: #{tpu_custom_call.1} parent=11 // pred_check_branch
          %140 = sbr.rel (%p138) target = $region20
        $region19: #{tpu_custom_call.1} parent=11 // pred_region
          _
        $region20: #{tpu_custom_call.1} parent=11 // pred_fallthru
          _
      $region12: #{tpu_custom_call.1} parent=5 // pred_fallthru
        _
      %p141 = scmp.lt.s32.totalorder %s16, 2
      // Predicated region
      $region21: #{tpu_custom_call.1} parent=5 // pred_check
        %p142 = pneg %p141
      $region22: #{tpu_custom_call.1} parent=5 // pred_check_branch
        %144 = sbr.rel (%p142) target = $region24
      $region23: #{tpu_custom_call.1} parent=5 // pred_region
        // Predicated region
        $region25: #{tpu_custom_call.1} parent=23 // pred_check
          %p145 = pneg %p36
        $region26: #{tpu_custom_call.1} parent=23 // pred_check_branch
          %147 = sbr.rel (%p145) target = $region28
        $region27: #{tpu_custom_call.1} parent=23 // pred_region
          %s148 = sand.u32 %s26, 1
          %s149 = scalar_lea.sflag [#allocation4], %s148
          %s150 = sand.u32 %s26, 1
          %s151 = smul.addr %s150, 8
          %s152 = scalar_lea.vmem [#allocation3], %s151
          %s154 = ssub.s32 128, 128
          %155 = vsyncadd %s149, %s154
          %s156 = smul.addr %s16, 128
          %s157 = scalar_lea.hbm %s0, %s156
          %s159 = sshll.u32 %s152, 4
          %s160 = int_to_ptr.vmem [resolvable:$true] %s159
          %162 = dma.hbm_to_vmem [thread:$0]  %s157, 128, %s160, %s149
        $region28: #{tpu_custom_call.1} parent=23 // pred_fallthru
          _
      $region24: #{tpu_custom_call.1} parent=5 // pred_fallthru
        _
      %p163 = scmp.le.s32.totalorder 1, %s16
      %p164 = scmp.lt.s32.totalorder %s16, 3
      %p165 = pnand %p163, %p164
      %p166 = pneg %p165
      // Predicated region
      $region29: #{tpu_custom_call.1} parent=5 // pred_check
        _
      $region30: #{tpu_custom_call.1} parent=5 // pred_check_branch
        %168 = sbr.rel (%p165) target = $region32
      $region31: #{tpu_custom_call.1} parent=5 // pred_region
        %s169 = ssub.s32 %s16, 1
        %s170 = sand.u32 %s29, 1
        %s171 = scalar_lea.sflag [#allocation4], %s170
        %s172 = sand.u32 %s29, 1
        %s173 = smul.addr %s172, 8
        %s174 = scalar_lea.vmem [#allocation3], %s173
        // Predicated region
        $region33: #{tpu_custom_call.1} parent=31 // pred_check
          %p175 = pneg %p42
        $region34: #{tpu_custom_call.1} parent=31 // pred_check_branch
          %177 = sbr.rel (%p175) target = $region36
        $region35: #{tpu_custom_call.1} parent=31 // pred_region
          %178 = dma.done %s171, 128
        $region36: #{tpu_custom_call.1} parent=31 // pred_fallthru
          _
        // Predicated region
        $region37: #{tpu_custom_call.1} parent=31 // pred_check
          %p179 = pneg %p63
        $region38: #{tpu_custom_call.1} parent=31 // pred_check_branch
          %181 = sbr.rel (%p179) target = $region40
        $region39: #{tpu_custom_call.1} parent=31 // pred_region
          %182 = dma.done [#allocation7], 1536
        $region40: #{tpu_custom_call.1} parent=31 // pred_fallthru
          _
        %s183 = sand.u32 %s29, 1
        %s184 = scalar_lea.sflag [#allocation4], %s183
        %s185 = sand.u32 %s29, 1
        %s186 = smul.addr %s185, 8
        %s187 = scalar_lea.vmem [#allocation3], %s186
        %p188 = pneg %p42
        %p189 = pneg %p39
        %p190 = pneg %p63
        %p191 = pneg %p60
        %p192 = pneg %p84
        %p193 = pneg %p81
        %p194 = pneg %p110
        %p195 = pneg %p107
        %s196 = sand.u32 %s97, 1
        %s197 = scalar_lea.sflag [#allocation5], %s196
        %s198 = sand.u32 %s97, 1
        %s199 = smul.addr %s198, 8
        %s200 = scalar_lea.vmem [#allocation8], %s199
        %v201 = vld [vmem:[%s174] sm:$0xff]
        %v202 = vld [vmem:[#allocation6] sm:$0xff]
        %v203 = vld [vmem:[#allocation6 + $0x8] sm:$0xff]
        %v204 = vld [vmem:[#allocation6 + $0x10] sm:$0xff]
        %v205 = vld [vmem:[#allocation6 + $0x18] sm:$0xff]
        %v206 = vld [vmem:[#allocation6 + $0x20] sm:$0xff]
        %v207 = vld [vmem:[#allocation6 + $0x28] sm:$0xff]
        %v208 = vld [vmem:[#allocation6 + $0x30] sm:$0xff]
        %v209 = vld [vmem:[#allocation6 + $0x38] sm:$0xff]
        %v210 = vld [vmem:[#allocation6 + $0x40] sm:$0xff]
        %v211 = vld [vmem:[#allocation6 + $0x48] sm:$0xff]
        %v212 = vld [vmem:[#allocation6 + $0x50] sm:$0xff]
        %v213 = vld [vmem:[#allocation6 + $0x58] sm:$0xff]
        %v214 = vld [vmem:[%s2] sm:$0x7]
        %v216 = vlaneseq
        %v217 = vshrl.u32 %v216, 7
        %v218 = vsub.s32 0, %v217
        %v219 = vrot.slane %v214, %v218
        %v220 = vlaneseq
        %v221 = vshrl.u32 %v220, 7
        %v222 = vsub.s32 1, %v221
        %v223 = vrot.slane %v214, %v222
        %v224 = vlaneseq
        %v225 = vshrl.u32 %v224, 7
        %v226 = vsub.s32 2, %v225
        %v227 = vrot.slane %v214, %v226
        %vm231 = vcmask 261120
        %v233 = vsel %vm231, %v201, 0
        %235 = vmatprep.subr.mxu0 %v203
        %236 = vmatpush1.msra.mxu0 %v202
        %237 = vmatprep.subr.mxu0 %v206
        %238 = vmatpush1.msra.mxu0 %v205
        %239 = vmatprep.subr.mxu0 %v209
        %240 = vmatpush1.msra.mxu0 %v208
        %241 = vmatprep.subr.mxu0 %v212
        %242 = vmatpush1.msra.mxu0 %v211
        %243 = vmatprep.subr.mxu0 0.0
        %244 = vmatpush1.msra.mxu0 0.0
        %245 = vmatprep.subr.mxu0 0.0
        %246 = vmatpush1.msra.mxu0 0.0
        %247 = vmatprep.subr.mxu0 0.0
        %248 = vmatpush1.msra.mxu0 0.0
        %249 = vmatprep.subr.mxu0 0.0
        %250 = vmatpush1.msra.mxu0 0.0
        %251 = vmatprep.subr.mxu0 0.0
        %252 = vmatpush1.msra.mxu0 0.0
        %253 = vmatprep.subr.mxu0 0.0
        %254 = vmatpush1.msra.mxu0 0.0
        %255 = vmatprep.subr.mxu0 0.0
        %256 = vmatpush1.msra.mxu0 0.0
        %257 = vmatprep.subr.mxu0 0.0
        %258 = vmatpush1.msra.mxu0 0.0
        %259 = vmatprep.subr.mxu0 0.0
        %260 = vmatpush1.msra.mxu0 0.0
        %261 = vmatprep.subr.mxu0 0.0
        %262 = vmatpush1.msra.mxu0 0.0
        %263 = vmatprep.subr.mxu0 0.0
        %264 = vmatpush1.msra.mxu0 0.0
        %265 = vmatprep.subr.mxu0 0.0
        %266 = vmatpush1.msra.mxu0 0.0
        %267 = vmatprep.subr.mxu0 0.0
        %268 = vmatpush1.msra.mxu0 0.0
        %269 = vmatprep.subr.mxu0 0.0
        %270 = vmatpush1.msra.mxu0 0.0
        %271 = vmatprep.subr.mxu0 0.0
        %272 = vmatpush1.msra.mxu0 0.0
        %273 = vmatprep.subr.mxu0 0.0
        %274 = vmatpush1.msra.mxu0 0.0
        %275 = vmatprep.subr.mxu0 0.0
        %276 = vmatpush1.msra.mxu0 0.0
        %277 = vmatprep.subr.mxu0 0.0
        %278 = vmatpush1.msra.mxu0 0.0
        %279 = vmatprep.subr.mxu0 0.0
        %280 = vmatpush1.msra.mxu0 0.0
        %281 = vmatprep.subr.mxu0 0.0
        %282 = vmatpush1.msra.mxu0 0.0
        %283 = vmatprep.subr.mxu0 0.0
        %284 = vmatpush1.msra.mxu0 0.0
        %285 = vmatprep.subr.mxu0 0.0
        %286 = vmatpush1.msra.mxu0 0.0
        %287 = vmatprep.subr.mxu0 0.0
        %288 = vmatpush1.msra.mxu0 0.0
        %289 = vmatprep.subr.mxu0 0.0
        %290 = vmatpush1.msra.mxu0 0.0
        %291 = vmatprep.subr.mxu0 0.0
        %292 = vmatpush1.msra.mxu0 0.0
        %293 = vmatprep.subr.mxu0 0.0
        %294 = vmatpush1.msra.mxu0 0.0
        %295 = vmatprep.subr.mxu0 0.0
        %296 = vmatpush1.msra.mxu0 0.0
        %297 = vmatprep.subr.mxu0 0.0
        %298 = vmatpush1.msra.mxu0 0.0
        %299 = vmatprep.mubr.f32.mxu0 0.0
        %300 = vmatmul.mubr.f32.gmra.mrb[0].mxu0 %v233
        %v301 = vpop.f32.mrb[0].mxu0
        %v302 = vadd.f32 %v219, %v301
        %v303 = vpop.f32.mrb[0].mxu0
        %v304 = vadd.f32 %v223, %v303
        %305 = vdwg.mxu0
        %306 = vmatprep.subr.mxu0 0.0
        %307 = vmatpush1.msra.mxu0 %v204
        %308 = vmatprep.subr.mxu0 0.0
        %309 = vmatpush1.msra.mxu0 %v207
        %310 = vmatprep.subr.mxu0 0.0
        %311 = vmatpush1.msra.mxu0 %v210
        %312 = vmatprep.subr.mxu0 0.0
        %313 = vmatpush1.msra.mxu0 %v213
        %314 = vmatprep.subr.mxu0 0.0
        %315 = vmatpush1.msra.mxu0 0.0
        %316 = vmatprep.subr.mxu0 0.0
        %317 = vmatpush1.msra.mxu0 0.0
        %318 = vmatprep.subr.mxu0 0.0
        %319 = vmatpush1.msra.mxu0 0.0
        %320 = vmatprep.subr.mxu0 0.0
        %321 = vmatpush1.msra.mxu0 0.0
        %322 = vmatprep.subr.mxu0 0.0
        %323 = vmatpush1.msra.mxu0 0.0
        %324 = vmatprep.subr.mxu0 0.0
        %325 = vmatpush1.msra.mxu0 0.0
        %326 = vmatprep.subr.mxu0 0.0
        %327 = vmatpush1.msra.mxu0 0.0
        %328 = vmatprep.subr.mxu0 0.0
        %329 = vmatpush1.msra.mxu0 0.0
        %330 = vmatprep.subr.mxu0 0.0
        %331 = vmatpush1.msra.mxu0 0.0
        %332 = vmatprep.subr.mxu0 0.0
        %333 = vmatpush1.msra.mxu0 0.0
        %334 = vmatprep.subr.mxu0 0.0
        %335 = vmatpush1.msra.mxu0 0.0
        %336 = vmatprep.subr.mxu0 0.0
        %337 = vmatpush1.msra.mxu0 0.0
        %338 = vmatprep.subr.mxu0 0.0
        %339 = vmatpush1.msra.mxu0 0.0
        %340 = vmatprep.subr.mxu0 0.0
        %341 = vmatpush1.msra.mxu0 0.0
        %342 = vmatprep.subr.mxu0 0.0
        %343 = vmatpush1.msra.mxu0 0.0
        %344 = vmatprep.subr.mxu0 0.0
        %345 = vmatpush1.msra.mxu0 0.0
        %346 = vmatprep.subr.mxu0 0.0
        %347 = vmatpush1.msra.mxu0 0.0
        %348 = vmatprep.subr.mxu0 0.0
        %349 = vmatpush1.msra.mxu0 0.0
        %350 = vmatprep.subr.mxu0 0.0
        %351 = vmatpush1.msra.mxu0 0.0
        %352 = vmatprep.subr.mxu0 0.0
        %353 = vmatpush1.msra.mxu0 0.0
        %354 = vmatprep.subr.mxu0 0.0
        %355 = vmatpush1.msra.mxu0 0.0
        %356 = vmatprep.subr.mxu0 0.0
        %357 = vmatpush1.msra.mxu0 0.0
        %358 = vmatprep.subr.mxu0 0.0
        %359 = vmatpush1.msra.mxu0 0.0
        %360 = vmatprep.subr.mxu0 0.0
        %361 = vmatpush1.msra.mxu0 0.0
        %362 = vmatprep.subr.mxu0 0.0
        %363 = vmatpush1.msra.mxu0 0.0
        %364 = vmatprep.subr.mxu0 0.0
        %365 = vmatpush1.msra.mxu0 0.0
        %366 = vmatprep.subr.mxu0 0.0
        %367 = vmatpush1.msra.mxu0 0.0
        %368 = vmatprep.subr.mxu0 0.0
        %369 = vmatpush1.msra.mxu0 0.0
        %370 = vmatprep.mubr.f32.mxu0 0.0
        %371 = vmatmul.mubr.f32.gmra.mrb[0].mxu0 %v233
        %v372 = vpop.f32.mrb[0].mxu0
        %v373 = vadd.f32 %v227, %v372
        %v374 = vpop.f32.mrb[0].mxu0
        %375 = vdwg.mxu0
        %376 = vst [vmem:[#allocation2] sm:$0xff] %v302
        %377 = vst [vmem:[#allocation2 + $0x8] sm:$0xff] %v304
        %378 = vst [vmem:[#allocation2 + $0x10] sm:$0xff] %v373
        %v379 = vld [vmem:[#allocation2] sm:$0xff]
        %v380 = vld [vmem:[#allocation2 + $0x8] sm:$0xff]
        %v381 = vld [vmem:[#allocation2 + $0x10] sm:$0xff]
        %382 = vmatprep.subr.mxu0 0.0
        %383 = vmatpush1.xpose.msra.mxu0 %v380
        %384 = vmatprep.subr.mxu0 0.0
        %385 = vmatpush1.xpose.msra.mxu0 0.0
        %386 = vmatprep.subr.mxu0 0.0
        %387 = vmatpush1.xpose.msra.mxu0 0.0
        %388 = vmatprep.subr.mxu0 0.0
        %389 = vmatpush1.xpose.msra.mxu0 0.0
        %390 = vmatprep.subr.mxu0 0.0
        %391 = vmatpush1.xpose.msra.mxu0 0.0
        %392 = vmatprep.subr.mxu0 0.0
        %393 = vmatpush1.xpose.msra.mxu0 0.0
        %394 = vmatprep.subr.mxu0 0.0
        %395 = vmatpush1.xpose.msra.mxu0 0.0
        %396 = vmatprep.subr.mxu0 0.0
        %397 = vmatpush1.xpose.msra.mxu0 0.0
        %398 = vmatprep.subr.mxu0 0.0
        %399 = vmatpush1.xpose.msra.mxu0 0.0
        %400 = vmatprep.subr.mxu0 0.0
        %401 = vmatpush1.xpose.msra.mxu0 0.0
        %402 = vmatprep.subr.mxu0 0.0
        %403 = vmatpush1.xpose.msra.mxu0 0.0
        %404 = vmatprep.subr.mxu0 0.0
        %405 = vmatpush1.xpose.msra.mxu0 0.0
        %406 = vmatprep.subr.mxu0 0.0
        %407 = vmatpush1.xpose.msra.mxu0 0.0
        %408 = vmatprep.subr.mxu0 0.0
        %409 = vmatpush1.xpose.msra.mxu0 0.0
        %410 = vmatprep.subr.mxu0 0.0
        %411 = vmatpush1.xpose.msra.mxu0 0.0
        %412 = vmatprep.subr.mxu0 0.0
        %413 = vmatpush1.xpose.msra.mxu0 0.0
        %414 = vmatprep.subr.mxu0 0.0
        %415 = vmatpush1.xpose.msra.mxu0 0.0
        %416 = vmatprep.subr.mxu0 0.0
        %417 = vmatpush1.xpose.msra.mxu0 0.0
        %418 = vmatprep.subr.mxu0 0.0
        %419 = vmatpush1.xpose.msra.mxu0 0.0
        %420 = vmatprep.subr.mxu0 0.0
        %421 = vmatpush1.xpose.msra.mxu0 0.0
        %422 = vmatprep.subr.mxu0 0.0
        %423 = vmatpush1.xpose.msra.mxu0 0.0
        %424 = vmatprep.subr.mxu0 0.0
        %425 = vmatpush1.xpose.msra.mxu0 0.0
        %426 = vmatprep.subr.mxu0 0.0
        %427 = vmatpush1.xpose.msra.mxu0 0.0
        %428 = vmatprep.subr.mxu0 0.0
        %429 = vmatpush1.xpose.msra.mxu0 0.0
        %430 = vmatprep.subr.mxu0 0.0
        %431 = vmatpush1.xpose.msra.mxu0 0.0
        %432 = vmatprep.subr.mxu0 0.0
        %433 = vmatpush1.xpose.msra.mxu0 0.0
        %434 = vmatprep.subr.mxu0 0.0
        %435 = vmatpush1.xpose.msra.mxu0 0.0
        %436 = vmatprep.subr.mxu0 0.0
        %437 = vmatpush1.xpose.msra.mxu0 0.0
        %438 = vmatprep.subr.mxu0 0.0
        %439 = vmatpush1.xpose.msra.mxu0 0.0
        %440 = vmatprep.subr.mxu0 0.0
        %441 = vmatpush1.xpose.msra.mxu0 0.0
        %442 = vmatprep.subr.mxu0 0.0
        %443 = vmatpush1.xpose.msra.mxu0 0.0
        %444 = vmatprep.subr.mxu0 0.0
        %445 = vmatpush1.xpose.msra.mxu0 0.0
        %446 = vmatprep.mubr.f32.mxu0 0.0
        %447 = vmatmul.mubr.f32.gmra.mrb[0].mxu0 %v379
        %v448 = vpop.f32.mrb[0].mxu0
        %v449 = vadd.f32 0.0, %v448
        %v450 = vpop.f32.mrb[0].mxu0
        %451 = vdwg.mxu0
        %vm452 = vcmask 64512
        %v453 = vsel %vm452, %v449, -inf
        %454 = vmax.xlane.f32.xlu0 %v453
        %v455 = vpop.xlane.xlu0 %454
        %v456 = vsub.f32 %v449, %v455
        %v457 = vmul.f32 %v456, 1.442695
        %v458 = vpow.pop %v457
        %v459 = vsel %vm452, %v458, 0.0
        %460 = vadd.xlane.f32.xlu0 %v459
        %v461 = vpop.xlane.xlu0 %460
        %v462 = vrcp.pop %v461
        %v463 = vmul.f32 %v458, %v462
        %v465 = vsel %vm452, %v463, 0
        %467 = vmatprep.subr.mxu0 0.0
        %468 = vmatpush1.msra.mxu0 %v381
        %469 = vmatprep.subr.mxu0 0.0
        %470 = vmatpush1.msra.mxu0 0.0
        %471 = vmatprep.subr.mxu0 0.0
        %472 = vmatpush1.msra.mxu0 0.0
        %473 = vmatprep.subr.mxu0 0.0
        %474 = vmatpush1.msra.mxu0 0.0
        %475 = vmatprep.subr.mxu0 0.0
        %476 = vmatpush1.msra.mxu0 0.0
        %477 = vmatprep.subr.mxu0 0.0
        %478 = vmatpush1.msra.mxu0 0.0
        %479 = vmatprep.subr.mxu0 0.0
        %480 = vmatpush1.msra.mxu0 0.0
        %481 = vmatprep.subr.mxu0 0.0
        %482 = vmatpush1.msra.mxu0 0.0
        %483 = vmatprep.subr.mxu0 0.0
        %484 = vmatpush1.msra.mxu0 0.0
        %485 = vmatprep.subr.mxu0 0.0
        %486 = vmatpush1.msra.mxu0 0.0
        %487 = vmatprep.subr.mxu0 0.0
        %488 = vmatpush1.msra.mxu0 0.0
        %489 = vmatprep.subr.mxu0 0.0
        %490 = vmatpush1.msra.mxu0 0.0
        %491 = vmatprep.subr.mxu0 0.0
        %492 = vmatpush1.msra.mxu0 0.0
        %493 = vmatprep.subr.mxu0 0.0
        %494 = vmatpush1.msra.mxu0 0.0
        %495 = vmatprep.subr.mxu0 0.0
        %496 = vmatpush1.msra.mxu0 0.0
        %497 = vmatprep.subr.mxu0 0.0
        %498 = vmatpush1.msra.mxu0 0.0
        %499 = vmatprep.subr.mxu0 0.0
        %500 = vmatpush1.msra.mxu0 0.0
        %501 = vmatprep.subr.mxu0 0.0
        %502 = vmatpush1.msra.mxu0 0.0
        %503 = vmatprep.subr.mxu0 0.0
        %504 = vmatpush1.msra.mxu0 0.0
        %505 = vmatprep.subr.mxu0 0.0
        %506 = vmatpush1.msra.mxu0 0.0
        %507 = vmatprep.subr.mxu0 0.0
        %508 = vmatpush1.msra.mxu0 0.0
        %509 = vmatprep.subr.mxu0 0.0
        %510 = vmatpush1.msra.mxu0 0.0
        %511 = vmatprep.subr.mxu0 0.0
        %512 = vmatpush1.msra.mxu0 0.0
        %513 = vmatprep.subr.mxu0 0.0
        %514 = vmatpush1.msra.mxu0 0.0
        %515 = vmatprep.subr.mxu0 0.0
        %516 = vmatpush1.msra.mxu0 0.0
        %517 = vmatprep.subr.mxu0 0.0
        %518 = vmatpush1.msra.mxu0 0.0
        %519 = vmatprep.subr.mxu0 0.0
        %520 = vmatpush1.msra.mxu0 0.0
        %521 = vmatprep.subr.mxu0 0.0
        %522 = vmatpush1.msra.mxu0 0.0
        %523 = vmatprep.subr.mxu0 0.0
        %524 = vmatpush1.msra.mxu0 0.0
        %525 = vmatprep.subr.mxu0 0.0
        %526 = vmatpush1.msra.mxu0 0.0
        %527 = vmatprep.subr.mxu0 0.0
        %528 = vmatpush1.msra.mxu0 0.0
        %529 = vmatprep.subr.mxu0 0.0
        %530 = vmatpush1.msra.mxu0 0.0
        %531 = vmatprep.mubr.f32.mxu0 0.0
        %532 = vmatmul.mubr.f32.gmra.mrb[0].mxu0 %v465
        %v533 = vpop.f32.mrb[0].mxu0
        %v534 = vadd.f32 %v381, %v533
        %v535 = vpop.f32.mrb[0].mxu0
        %536 = vdwg.mxu0
        %537 = vst [vmem:[%s200] sm:$0xff] %v534
        %s538 = sand.u32 %s97, 1
        %s539 = scalar_lea.sflag [#allocation5], %s538
        %s540 = sand.u32 %s97, 1
        %s541 = smul.addr %s540, 8
        %s542 = scalar_lea.vmem [#allocation8], %s541
        // Predicated region
        $region41: #{tpu_custom_call.1} parent=31 // pred_check
          %p543 = pneg %p107
        $region42: #{tpu_custom_call.1} parent=31 // pred_check_branch
          %545 = sbr.rel (%p543) target = $region44
        $region43: #{tpu_custom_call.1} parent=31 // pred_region
          %s547 = ssub.s32 128, 128
          %548 = vsyncadd %s539, %s547
          %s549 = smul.addr %s21, 128
          %s550 = scalar_lea.hbm %s3, %s549
          %s552 = sshll.u32 %s542, 4
          %s553 = int_to_ptr.vmem [resolvable:$true] %s552
          %555 = dma.vmem_to_hbm [thread:$0]  %s553, 128, %s550, %s539
        $region44: #{tpu_custom_call.1} parent=31 // pred_fallthru
          _
      $region32: #{tpu_custom_call.1} parent=5 // pred_fallthru
        _
      %p556 = scmp.le.s32.totalorder 2, %s16
      // Predicated region
      $region45: #{tpu_custom_call.1} parent=5 // pred_check
        %p557 = pneg %p556
      $region46: #{tpu_custom_call.1} parent=5 // pred_check_branch
        %559 = sbr.rel (%p557) target = $region48
      $region47: #{tpu_custom_call.1} parent=5 // pred_region
        %s560 = ssub.s32 %s16, 2
        // Predicated region
        $region49: #{tpu_custom_call.1} parent=47 // pred_check
          %p561 = pneg %p113
        $region50: #{tpu_custom_call.1} parent=47 // pred_check_branch
          %563 = sbr.rel (%p561) target = $region52
        $region51: #{tpu_custom_call.1} parent=47 // pred_region
          %s564 = sand.u32 %s98, 1
          %s565 = scalar_lea.sflag [#allocation5], %s564
          %s566 = sand.u32 %s98, 1
          %s567 = smul.addr %s566, 8
          %s568 = scalar_lea.vmem [#allocation8], %s567
          %569 = dma.done %s565, 128
        $region52: #{tpu_custom_call.1} parent=47 // pred_fallthru
          _
      $region48: #{tpu_custom_call.1} parent=5 // pred_fallthru
        _
    $region6: #{tpu_custom_call.1} parent=1 // loop_footer
      %s20 = sadd.s32 1, %s16
    $region7: #{tpu_custom_call.1} parent=1 // loop_footer_branch
      %15 = sbr.rel target = $region3
    $region8: #{tpu_custom_call.1} parent=1 // loop_exit
      _
    %570 = vsyncpa [#allocation4], 1
    %s571 = scalar_lea.sflag [#allocation4], 1
    %572 = vsyncpa %s571, 1
    %573 = vsyncpa [#allocation7], 1
    %574 = vsyncpa [#allocation5], 1
    %s575 = scalar_lea.sflag [#allocation5], 1
    %576 = vsyncpa %s575, 1

</llo_original>
